<compile_context>
chip_gen: v6e
topology: v6e:2x2x1
jax: 0.10.0
libtpu: 0.0.40
codegen_flags: <defaults>
</compile_context>

<pallas_src>
import jax
import jax.numpy as jnp
from jax.experimental import pallas as pl
from jax.experimental.pallas import tpu as pltpu

LANE = 128            # TPU lane width
MAX_TILE_B = 65536    # ~11.5 MiB f32 VMEM/tile -> safe on v5e / v6e / v7x
MIN_GRID_STEPS = 8    # keep both v7x TCs busy + deep double-buffering


def mlp_kernel(xT_ref, w1T_ref, b1T_ref, w2T_ref, b2T_ref, oT_ref):
    # All refs are in "batch-on-lanes" layout: feature dim on sublanes,
    # batch dim on the fast 128-wide lane axis.
    xT = xT_ref[...]                                                   # (3, TB)
    # Layer 1: hT = W1^T @ xT + b1   (K=3, N=TB fills the MXU), ReLU.
    h = jnp.dot(w1T_ref[...], xT, preferred_element_type=jnp.float32)  # (32, TB)
    h = jnp.maximum(h + b1T_ref[...], 0.0)                             # (32,1) bcast over lanes
    # Layer 2: yT = W2^T @ hT + b2
    y = jnp.dot(w2T_ref[...], h, preferred_element_type=jnp.float32)   # (3, TB)
    oT_ref[...] = (y + b2T_ref[...]).astype(oT_ref.dtype)


def _round_up(v, m):
    return ((v + m - 1) // m) * m


def bisnis_assistant_forward(x, w1, b1, w2, b2, *, max_tile_b=MAX_TILE_B):
    """Forward pass. x: (B, 3), w1: (3, 32), b1: (1, 32)|(32,),
    w2: (32, 3), b2: (1, 3)|(3,). Returns (B, 3)."""
    B, in_f = x.shape
    hid = w1.shape[1]
    out_f = w2.shape[1]

    # Batch tile: as large as possible (amortize ~0.35us/step), but keep at
    # least MIN_GRID_STEPS grid steps for large batches (megacore + pipeline),
    # always a multiple of 128 lanes and capped at max_tile_b for VMEM.
    tb = min(max_tile_b, _round_up(pl.cdiv(B, MIN_GRID_STEPS), LANE))
    tb = max(tb, LANE)
    n_tiles = pl.cdiv(B, tb)
    Bp = n_tiles * tb

    # Batch-on-lanes layout; single fused pad only when the batch is ragged.
    xT = x.T                                                           # (3, B)
    if Bp != B:
        xT = jnp.pad(xT, ((0, 0), (0, Bp - B)))                        # (3, Bp)
    w1T = w1.T                                                         # (32, 3)
    b1T = b1.reshape(1, hid).T                                         # (32, 1)
    w2T = w2.T                                                         # (3, 32)
    b2T = b2.reshape(1, out_f).T                                       # (3, 1)

    grid_spec = pltpu.PrefetchScalarGridSpec(
        num_scalar_prefetch=0,
        grid=(n_tiles,),
        in_specs=[
            pl.BlockSpec((in_f, tb), lambda i: (0, i)),    # x tile, streamed
            pl.BlockSpec((hid, in_f), lambda i: (0, 0)),   # W1^T, VMEM-resident
            pl.BlockSpec((hid, 1), lambda i: (0, 0)),      # b1,   VMEM-resident
            pl.BlockSpec((out_f, hid), lambda i: (0, 0)),  # W2^T, VMEM-resident
            pl.BlockSpec((out_f, 1), lambda i: (0, 0)),    # b2,   VMEM-resident
        ],
        out_specs=pl.BlockSpec((out_f, tb), lambda i: (0, i)),
    )

    yT = pl.pallas_call(
        mlp_kernel,
        out_shape=jax.ShapeDtypeStruct((out_f, Bp), x.dtype),
        grid_spec=grid_spec,
        compiler_params=pltpu.CompilerParams(
            dimension_semantics=("parallel",),      # batch axis over TCs (v7x)
            vmem_limit_bytes=32 * 1024 * 1024,      # >= ~3x peak use; safe on all gens
        ),
    )(xT, w1T, b1T, w2T, b2T)

    if Bp != B:
        yT = yT[:, :B]     # drop padded columns (garbage by construction)
    return yT.T                                                        # (B, 3)


def init_params(key):
    """Deterministic init matching PyTorch Linear shapes.

    PyTorch Linear(in, out) has weight (out, in), bias (out,), init
    U(-1/sqrt(in), 1/sqrt(in)). We store weights transposed as (in, out)
    so the math is x @ W + b == PyTorch's x @ W.T + b.
    """
    k1, k2, k3, k4 = jax.random.split(key, 4)
    in1, hid, out = 3, 32, 3
    bound1 = 1.0 / jnp.sqrt(jnp.float32(in1))
    bound2 = 1.0 / jnp.sqrt(jnp.float32(hid))
    w1 = jax.random.uniform(k1, (in1, hid), jnp.float32, -bound1, bound1)
    b1 = jax.random.uniform(k2, (1, hid), jnp.float32, -bound1, bound1)
    w2 = jax.random.uniform(k3, (hid, out), jnp.float32, -bound2, bound2)
    b2 = jax.random.uniform(k4, (1, out), jnp.float32, -bound2, bound2)
    return w1, b1, w2, b2


if __name__ == "__main__":
    key = jax.random.PRNGKey(0)
    kx, kp = jax.random.split(key)

    w1, b1, w2, b2 = init_params(kp)

    def ref_fn(xx):
        h = jnp.maximum(
            jnp.dot(xx, w1, precision=jax.lax.Precision.HIGHEST) + b1, 0.0)
        return jnp.dot(h, w2, precision=jax.lax.Precision.HIGHEST) + b2

    # Small shape consistent with the module: batch of 8 feature-3 rows.
    x_small = jax.random.normal(kx, (8, 3), dtype=jnp.float32)
    out_small = jax.block_until_ready(
        bisnis_assistant_forward(x_small, w1, b1, w2, b2))
    assert out_small.shape == (8, 3)
    assert jnp.allclose(out_small, ref_fn(x_small), atol=1e-5, rtol=1e-5)

    # Ragged multi-tile path (grid > 1, padded batch): tb=128, grid=3.
    x_mid = jax.random.normal(kx, (300, 3), dtype=jnp.float32)
    out_mid = jax.block_until_ready(
        bisnis_assistant_forward(x_mid, w1, b1, w2, b2))
    assert out_mid.shape == (300, 3)
    assert jnp.allclose(out_mid, ref_fn(x_mid), atol=1e-5, rtol=1e-5)

    # Larger batch exercising the MIN_GRID_STEPS tiling (tb=512, grid=8).
    x_big = jax.random.normal(kx, (4096, 3), dtype=jnp.float32)
    out_big = jax.block_until_ready(
        bisnis_assistant_forward(x_big, w1, b1, w2, b2))
    assert out_big.shape == (4096, 3)
    assert jnp.allclose(out_big, ref_fn(x_big), atol=1e-5, rtol=1e-5)

    print("KERNEL_OK")
</pallas_src>

<mosaic_0001>
module attributes {stable_mosaic.version = 11 : i64} {
  func.func @mlp_kernel(%arg0: i32, %arg1: memref<3x128xf32, #tpu.memory_space<vmem>>, %arg2: memref<32x3xf32, #tpu.memory_space<vmem>>, %arg3: memref<32x1xf32, #tpu.memory_space<vmem>>, %arg4: memref<3x32xf32, #tpu.memory_space<vmem>>, %arg5: memref<3x1xf32, #tpu.memory_space<vmem>>, %arg6: memref<3x128xf32, #tpu.memory_space<vmem>>) attributes {dimension_semantics = [#tpu.dimension_semantics<parallel>], iteration_bounds = array<i64: 1>, scalar_prefetch = 0 : i64, scratch_operands = 0 : i64, tpu.core_type = #tpu.core_type<tc>, window_params = [{transform_indices = @transform_0, window_bounds = array<i64: 3, 128>}, {pipeline_mode = #tpu.pipeline_mode<synchronous>, transform_indices = @transform_1, window_bounds = array<i64: 32, 3>}, {pipeline_mode = #tpu.pipeline_mode<synchronous>, transform_indices = @transform_2, window_bounds = array<i64: 32, 1>}, {pipeline_mode = #tpu.pipeline_mode<synchronous>, transform_indices = @transform_3, window_bounds = array<i64: 3, 32>}, {pipeline_mode = #tpu.pipeline_mode<synchronous>, transform_indices = @transform_4, window_bounds = array<i64: 3, 1>}, {transform_indices = @transform_5, window_bounds = array<i64: 3, 128>}]} {
    %c0 = arith.constant 0 : index
    %c0_0 = arith.constant 0 : index
    %0 = vector.load %arg1[%c0, %c0_0] : memref<3x128xf32, #tpu.memory_space<vmem>>, vector<3x128xf32>
    %c0_1 = arith.constant 0 : index
    %c0_2 = arith.constant 0 : index
    %1 = vector.load %arg2[%c0_1, %c0_2] : memref<32x3xf32, #tpu.memory_space<vmem>>, vector<32x3xf32>
    %cst = arith.constant dense<0.000000e+00> : vector<32x128xf32>
    %2 = tpu.matmul %1, %0, %cst {dimension_numbers = #tpu.dot_dimension_numbers<[1], [0], [0], [1], [0, 0, 1, 1], [], []>} : vector<32x3xf32>, vector<3x128xf32>, vector<32x128xf32> -> vector<32x128xf32>
    %c0_3 = arith.constant 0 : index
    %c0_4 = arith.constant 0 : index
    %3 = vector.load %arg3[%c0_3, %c0_4] : memref<32x1xf32, #tpu.memory_space<vmem>>, vector<32x1xf32>
    %4 = vector.broadcast %3 : vector<32x1xf32> to vector<32x128xf32>
    %5 = arith.addf %2, %4 : vector<32x128xf32>
    %cst_5 = arith.constant 0.000000e+00 : f32
    %6 = vector.broadcast %cst_5 : f32 to vector<32x128xf32>
    %7 = arith.maximumf %5, %6 : vector<32x128xf32>
    %c0_6 = arith.constant 0 : index
    %c0_7 = arith.constant 0 : index
    %8 = vector.load %arg4[%c0_6, %c0_7] : memref<3x32xf32, #tpu.memory_space<vmem>>, vector<3x32xf32>
    %cst_8 = arith.constant dense<0.000000e+00> : vector<3x128xf32>
    %9 = tpu.matmul %8, %7, %cst_8 {dimension_numbers = #tpu.dot_dimension_numbers<[1], [0], [0], [1], [0, 0, 1, 1], [], []>} : vector<3x32xf32>, vector<32x128xf32>, vector<3x128xf32> -> vector<3x128xf32>
    %c0_9 = arith.constant 0 : index
    %c0_10 = arith.constant 0 : index
    %10 = vector.load %arg5[%c0_9, %c0_10] : memref<3x1xf32, #tpu.memory_space<vmem>>, vector<3x1xf32>
    %11 = vector.broadcast %10 : vector<3x1xf32> to vector<3x128xf32>
    %12 = arith.addf %9, %11 : vector<3x128xf32>
    %c0_11 = arith.constant 0 : index
    %c0_12 = arith.constant 0 : index
    %13 = vector.load %arg6[%c0_11, %c0_12] : memref<3x128xf32, #tpu.memory_space<vmem>>, vector<3x128xf32>
    tpu.vector_store %arg6[%c0_11, %c0_12], %12 {strides = array<i32>} : memref<3x128xf32, #tpu.memory_space<vmem>>, vector<3x128xf32>,
    return
  }
  func.func @transform_0(%arg0: i32) -> (i32, i32) {
    %c0_i32 = arith.constant 0 : i32
    %c0_i32_0 = arith.constant 0 : i32
    return %c0_i32, %arg0 : i32, i32
  }
  func.func @transform_1(%arg0: i32) -> (i32, i32) {
    %c0_i32 = arith.constant 0 : i32
    %c0_i32_0 = arith.constant 0 : i32
    %c0_i32_1 = arith.constant 0 : i32
    return %c0_i32, %c0_i32_0 : i32, i32
  }
  func.func @transform_2(%arg0: i32) -> (i32, i32) {
    %c0_i32 = arith.constant 0 : i32
    %c0_i32_0 = arith.constant 0 : i32
    %c0_i32_1 = arith.constant 0 : i32
    return %c0_i32, %c0_i32_0 : i32, i32
  }
  func.func @transform_3(%arg0: i32) -> (i32, i32) {
    %c0_i32 = arith.constant 0 : i32
    %c0_i32_0 = arith.constant 0 : i32
    %c0_i32_1 = arith.constant 0 : i32
    return %c0_i32, %c0_i32_0 : i32, i32
  }
  func.func @transform_4(%arg0: i32) -> (i32, i32) {
    %c0_i32 = arith.constant 0 : i32
    %c0_i32_0 = arith.constant 0 : i32
    %c0_i32_1 = arith.constant 0 : i32
    return %c0_i32, %c0_i32_0 : i32, i32
  }
  func.func @transform_5(%arg0: i32) -> (i32, i32) {
    %c0_i32 = arith.constant 0 : i32
    %c0_i32_0 = arith.constant 0 : i32
    return %c0_i32, %arg0 : i32, i32
  }
}

</mosaic_0001>

<llo_original>
// kernel: tpu_custom_call.1
$region0: #{tpu_custom_call.1}
  #allocation0 [shape = 'u32[]', space=smem, size = 0x4, offset = 0x4, fixed_abs, tag = 'smem constant byte address 0x4 - core index']
  #allocation1 [shape = 'u32[144,128]{1,0:T(1,128)}', space=vmem, size = 0x12000, scoped, tag = 'internal scratch']
  %s0 = inlined_call_operand.vmem [shape: f32[3,128], index: 0, kind: input, shape index: {}]
  %s1 = inlined_call_operand.vmem [shape: f32[32,3], index: 1, kind: input, shape index: {}]
  %s2 = inlined_call_operand.vmem [shape: f32[32,1], index: 2, kind: input, shape index: {}]
  %s3 = inlined_call_operand.vmem [shape: f32[3,32], index: 3, kind: input, shape index: {}]
  %s4 = inlined_call_operand.vmem [shape: f32[3,1], index: 4, kind: input, shape index: {}]
  %s5 = inlined_call_operand.hbm [shape: f32[3,128], index: 5, kind: output, shape index: {}]
  %s6 = sld [smem:[#allocation0]]
  $region30: #{tpu_custom_call.1} parent=0
    _
  %s8 = ssub.s32 1, %s6
  %s9 = scalar_select 0, %s8, %s6
  $region1: #{tpu_custom_call.1} parent=0
    #allocation2 [shape = 'u8[2048]{0}', space=vmem, size = 0x800, scoped, tag = 'output window, operand 0, single buffered']
    #allocation3 [shape = 's32[1]{0}', space=sflag, size = 0x4, scoped, tag = 'scoped memory for tpu_custom_call.1']
    %10 = vsyncpa [#allocation3], 0
    // Predicated region
    $region2: #{tpu_custom_call.1} parent=1 // pred_check
      _
    $region3: #{tpu_custom_call.1} parent=1 // pred_check_branch
      %12 = sbr.rel (0) target = $region5
    $region4: #{tpu_custom_call.1} parent=1 // pred_region
      _
    $region5: #{tpu_custom_call.1} parent=1 // pred_fallthru
      _
    // Predicated region
    $region6: #{tpu_custom_call.1} parent=1 // pred_check
      _
    $region7: #{tpu_custom_call.1} parent=1 // pred_check_branch
      %14 = sbr.rel (0) target = $region9
    $region8: #{tpu_custom_call.1} parent=1 // pred_region
      _
    $region9: #{tpu_custom_call.1} parent=1 // pred_fallthru
      _
    // Predicated region
    $region10: #{tpu_custom_call.1} parent=1 // pred_check
      _
    $region11: #{tpu_custom_call.1} parent=1 // pred_check_branch
      %16 = sbr.rel (0) target = $region13
    $region12: #{tpu_custom_call.1} parent=1 // pred_region
      _
    $region13: #{tpu_custom_call.1} parent=1 // pred_fallthru
      _
    // Predicated region
    $region14: #{tpu_custom_call.1} parent=1 // pred_check
      _
    $region15: #{tpu_custom_call.1} parent=1 // pred_check_branch
      %18 = sbr.rel (0) target = $region17
    $region16: #{tpu_custom_call.1} parent=1 // pred_region
      _
    $region17: #{tpu_custom_call.1} parent=1 // pred_fallthru
      _
    // Predicated region
    $region18: #{tpu_custom_call.1} parent=1 // pred_check
      _
    $region19: #{tpu_custom_call.1} parent=1 // pred_check_branch
      %20 = sbr.rel (0) target = $region21
    $region20: #{tpu_custom_call.1} parent=1 // pred_region
      _
    $region21: #{tpu_custom_call.1} parent=1 // pred_fallthru
      _
    %v21 = vld [vmem:[%s0] sm:$0x7]
    %v22 = vld [vmem:[%s1] sm:$0xff]
    %v23 = vld [vmem:[%s1 + $0x8] sm:$0xff]
    %v24 = vld [vmem:[%s1 + $0x10] sm:$0xff]
    %v25 = vld [vmem:[%s1 + $0x18] sm:$0xff]
    %v26 = vld [vmem:[%s2] sm:$0xff]
    %v27 = vld [vmem:[%s2 + $0x8] sm:$0xff]
    %v28 = vld [vmem:[%s2 + $0x10] sm:$0xff]
    %v29 = vld [vmem:[%s2 + $0x18] sm:$0xff]
    %31 = vset.pattern.permute.xlu0 0
    %32 = vperm.xlu0 %31, %v26
    %v33 = vpop.permute.xlu0 %32
    %36 = vset.pattern.permute.xlu0 0
    %37 = vperm.xlu0 %36, %v27
    %v38 = vpop.permute.xlu0 %37
    %41 = vset.pattern.permute.xlu0 0
    %42 = vperm.xlu0 %41, %v28
    %v43 = vpop.permute.xlu0 %42
    %46 = vset.pattern.permute.xlu0 0
    %47 = vperm.xlu0 %46, %v29
    %v48 = vpop.permute.xlu0 %47
    %vm50 = vcmask 23552
    %v52 = vsel %vm50, %v22, 0
    %v55 = vsel %vm50, %v23, 0
    %v58 = vsel %vm50, %v24, 0
    %v61 = vsel %vm50, %v25, 0
    %vm63 = vcmask 1042432
    %v65 = vsel %vm63, %v21, 0
    %67 = vmatprep.subr.mxu0 0.0
    %68 = vmatpush1.msra.mxu0 0.0
    %69 = vmatprep.subr.mxu0 0.0
    %70 = vmatpush1.msra.mxu0 0.0
    %71 = vmatprep.subr.mxu0 0.0
    %72 = vmatpush1.msra.mxu0 0.0
    %73 = vmatprep.subr.mxu0 0.0
    %74 = vmatpush1.msra.mxu0 0.0
    %75 = vmatprep.subr.mxu0 0.0
    %76 = vmatpush1.msra.mxu0 0.0
    %77 = vmatprep.subr.mxu0 0.0
    %78 = vmatpush1.msra.mxu0 0.0
    %79 = vmatprep.subr.mxu0 0.0
    %80 = vmatpush1.msra.mxu0 0.0
    %81 = vmatprep.subr.mxu0 0.0
    %82 = vmatpush1.msra.mxu0 0.0
    %83 = vmatprep.subr.mxu0 0.0
    %84 = vmatpush1.msra.mxu0 0.0
    %85 = vmatprep.subr.mxu0 0.0
    %86 = vmatpush1.msra.mxu0 0.0
    %87 = vmatprep.subr.mxu0 0.0
    %88 = vmatpush1.msra.mxu0 0.0
    %89 = vmatprep.subr.mxu0 0.0
    %90 = vmatpush1.msra.mxu0 0.0
    %91 = vmatprep.subr.mxu0 0.0
    %92 = vmatpush1.msra.mxu0 0.0
    %93 = vmatprep.subr.mxu0 0.0
    %94 = vmatpush1.msra.mxu0 0.0
    %95 = vmatprep.subr.mxu0 0.0
    %96 = vmatpush1.msra.mxu0 0.0
    %97 = vmatprep.subr.mxu0 0.0
    %98 = vmatpush1.msra.mxu0 %v65
    %99 = vmatprep.subr.mxu0 0.0
    %100 = vmatpush2.msra.mxu0 0.0
    %101 = vmatprep.subr.mxu0 0.0
    %102 = vmatpush2.msra.mxu0 0.0
    %103 = vmatprep.subr.mxu0 0.0
    %104 = vmatpush2.msra.mxu0 0.0
    %105 = vmatprep.subr.mxu0 0.0
    %106 = vmatpush2.msra.mxu0 0.0
    %107 = vmatprep.subr.mxu0 0.0
    %108 = vmatpush2.msra.mxu0 0.0
    %109 = vmatprep.subr.mxu0 0.0
    %110 = vmatpush2.msra.mxu0 0.0
    %111 = vmatprep.subr.mxu0 0.0
    %112 = vmatpush2.msra.mxu0 0.0
    %113 = vmatprep.subr.mxu0 0.0
    %114 = vmatpush2.msra.mxu0 0.0
    %115 = vmatprep.subr.mxu0 0.0
    %116 = vmatpush2.msra.mxu0 0.0
    %117 = vmatprep.subr.mxu0 0.0
    %118 = vmatpush2.msra.mxu0 0.0
    %119 = vmatprep.subr.mxu0 0.0
    %120 = vmatpush2.msra.mxu0 0.0
    %121 = vmatprep.subr.mxu0 0.0
    %122 = vmatpush2.msra.mxu0 0.0
    %123 = vmatprep.subr.mxu0 0.0
    %124 = vmatpush2.msra.mxu0 0.0
    %125 = vmatprep.subr.mxu0 0.0
    %126 = vmatpush2.msra.mxu0 0.0
    %127 = vmatprep.subr.mxu0 0.0
    %128 = vmatpush2.msra.mxu0 0.0
    %129 = vmatprep.subr.mxu0 0.0
    %130 = vmatpush2.msra.mxu0 0.0
    %131 = vmatprep.mubr.f32.mxu0 0.0
    %132 = vmatmul.mubr.f32.gmra.mxu0 %v52
    %v133 = vpop.f32.mrf.mxu0
    %v134 = vadd.f32 %v33, %v133
    %v135 = vpop.f32.mrf.mxu0
    %136 = vmatprep.mubr.f32.mxu0 0.0
    %137 = vmatmul.mubr.f32.gmra.mxu0 %v55
    %v138 = vpop.f32.mrf.mxu0
    %v139 = vadd.f32 %v38, %v138
    %v140 = vpop.f32.mrf.mxu0
    %141 = vmatprep.mubr.f32.mxu0 0.0
    %142 = vmatmul.mubr.f32.gmra.mxu0 %v58
    %v143 = vpop.f32.mrf.mxu0
    %v144 = vadd.f32 %v43, %v143
    %v145 = vpop.f32.mrf.mxu0
    %146 = vmatprep.mubr.f32.mxu0 0.0
    %147 = vmatmul.mubr.f32.gmra.mxu0 %v61
    %v148 = vpop.f32.mrf.mxu0
    %v149 = vadd.f32 %v48, %v148
    %v150 = vpop.f32.mrf.mxu0
    %151 = vdwg.mxu0
    %v152 = vmax.f32 %v134, 0.0
    %v153 = vmax.f32 %v139, 0.0
    %v154 = vmax.f32 %v144, 0.0
    %v155 = vmax.f32 %v149, 0.0
    %v156 = vld [vmem:[%s3] sm:$0x7]
    %v157 = vld [vmem:[%s4] sm:$0x7]
    %159 = vset.pattern.permute.xlu0 0
    %160 = vperm.xlu0 %159, %v157
    %v161 = vpop.permute.xlu0 %160
    %vm163 = vcmask 261120
    %v165 = vsel %vm163, %v156, 0
    %167 = vmatprep.subr.mxu0 0.0
    %168 = vmatpush1.msra.mxu0 0.0
    %169 = vmatprep.subr.mxu0 0.0
    %170 = vmatpush1.msra.mxu0 0.0
    %171 = vmatprep.subr.mxu0 0.0
    %172 = vmatpush1.msra.mxu0 0.0
    %173 = vmatprep.subr.mxu0 0.0
    %174 = vmatpush1.msra.mxu0 0.0
    %175 = vmatprep.subr.mxu0 0.0
    %176 = vmatpush1.msra.mxu0 0.0
    %177 = vmatprep.subr.mxu0 0.0
    %178 = vmatpush1.msra.mxu0 0.0
    %179 = vmatprep.subr.mxu0 0.0
    %180 = vmatpush1.msra.mxu0 0.0
    %181 = vmatprep.subr.mxu0 0.0
    %182 = vmatpush1.msra.mxu0 0.0
    %183 = vmatprep.subr.mxu0 0.0
    %184 = vmatpush1.msra.mxu0 0.0
    %185 = vmatprep.subr.mxu0 0.0
    %186 = vmatpush1.msra.mxu0 0.0
    %187 = vmatprep.subr.mxu0 0.0
    %188 = vmatpush1.msra.mxu0 0.0
    %189 = vmatprep.subr.mxu0 0.0
    %190 = vmatpush1.msra.mxu0 0.0
    %191 = vmatprep.subr.mxu0 0.0
    %192 = vmatpush1.msra.mxu0 %v155
    %193 = vmatprep.subr.mxu0 0.0
    %194 = vmatpush1.msra.mxu0 %v154
    %195 = vmatprep.subr.mxu0 0.0
    %196 = vmatpush1.msra.mxu0 %v153
    %197 = vmatprep.subr.mxu0 0.0
    %198 = vmatpush1.msra.mxu0 %v152
    %199 = vmatprep.subr.mxu0 0.0
    %200 = vmatpush2.msra.mxu0 0.0
    %201 = vmatprep.subr.mxu0 0.0
    %202 = vmatpush2.msra.mxu0 0.0
    %203 = vmatprep.subr.mxu0 0.0
    %204 = vmatpush2.msra.mxu0 0.0
    %205 = vmatprep.subr.mxu0 0.0
    %206 = vmatpush2.msra.mxu0 0.0
    %207 = vmatprep.subr.mxu0 0.0
    %208 = vmatpush2.msra.mxu0 0.0
    %209 = vmatprep.subr.mxu0 0.0
    %210 = vmatpush2.msra.mxu0 0.0
    %211 = vmatprep.subr.mxu0 0.0
    %212 = vmatpush2.msra.mxu0 0.0
    %213 = vmatprep.subr.mxu0 0.0
    %214 = vmatpush2.msra.mxu0 0.0
    %215 = vmatprep.subr.mxu0 0.0
    %216 = vmatpush2.msra.mxu0 0.0
    %217 = vmatprep.subr.mxu0 0.0
    %218 = vmatpush2.msra.mxu0 0.0
    %219 = vmatprep.subr.mxu0 0.0
    %220 = vmatpush2.msra.mxu0 0.0
    %221 = vmatprep.subr.mxu0 0.0
    %222 = vmatpush2.msra.mxu0 0.0
    %223 = vmatprep.subr.mxu0 0.0
    %224 = vmatpush2.msra.mxu0 0.0
    %225 = vmatprep.subr.mxu0 0.0
    %226 = vmatpush2.msra.mxu0 0.0
    %227 = vmatprep.subr.mxu0 0.0
    %228 = vmatpush2.msra.mxu0 0.0
    %229 = vmatprep.subr.mxu0 0.0
    %230 = vmatpush2.msra.mxu0 0.0
    %231 = vmatprep.mubr.f32.mxu0 0.0
    %232 = vmatmul.mubr.f32.gmra.mxu0 %v165
    %v233 = vpop.f32.mrf.mxu0
    %v234 = vadd.f32 %v161, %v233
    %v235 = vpop.f32.mrf.mxu0
    %236 = vdwg.mxu0
    %237 = vst [vmem:[#allocation2] sm:$0x7] %v234
    // Predicated region
    $region22: #{tpu_custom_call.1} parent=1 // pred_check
      _
    $region23: #{tpu_custom_call.1} parent=1 // pred_check_branch
      %239 = sbr.rel (0) target = $region25
    $region24: #{tpu_custom_call.1} parent=1 // pred_region
      %s241 = ssub.s32 64, 64
      %242 = vsyncadd [#allocation3], %s241
      %s244 = sshll.u32 [#allocation2], 4
      %s245 = int_to_ptr.vmem [resolvable:$true] %s244
      %247 = dma.vmem_to_hbm [thread:$0]  %s245, 64, %s5, [#allocation3]
    $region25: #{tpu_custom_call.1} parent=1 // pred_fallthru
      _
    // Predicated region
    $region26: #{tpu_custom_call.1} parent=1 // pred_check
      _
    $region27: #{tpu_custom_call.1} parent=1 // pred_check_branch
      %249 = sbr.rel (0) target = $region29
    $region28: #{tpu_custom_call.1} parent=1 // pred_region
      %250 = dma.done [#allocation3], 64
    $region29: #{tpu_custom_call.1} parent=1 // pred_fallthru
      _
    %251 = vsyncpa [#allocation3], 1

</llo_original>
